<compile_context>
chip_gen: v5e
topology: v5e:2x2
jax: 0.10.0
libtpu: 0.0.40
codegen_flags: <defaults>
</compile_context>

<pallas_src>
import jax
import jax.numpy as jnp
from jax.experimental import pallas as pl
from jax.experimental.pallas import tpu as pltpu

NEG_MASK = -1e30  # padded-logit bias value -> exp() underflows to exactly 0
LANE = 128
SUBLANE = 8


def _round_up(n, m):
    return (n + m - 1) // m * m


def policy_mlp_kernel(x_ref, w1_ref, b1_ref, w2_ref, b2_ref, w3_ref, b3_ref, o_ref):
    """Fused (padded, lane-dense) MLP + softmax over one batch tile."""
    x = x_ref[...]

    # Hidden block 1: Linear -> (Dropout: identity in eval) -> ReLU
    h = jnp.dot(x, w1_ref[...], preferred_element_type=jnp.float32) + b1_ref[...]
    h = jnp.maximum(h, 0.0)

    # Hidden block 2: Linear -> (Dropout: identity in eval) -> ReLU
    h = jnp.dot(h, w2_ref[...], preferred_element_type=jnp.float32) + b2_ref[...]
    h = jnp.maximum(h, 0.0)

    # Output Linear (padded action lanes carry bias = -1e30 -> softmax weight 0)
    logits = jnp.dot(h, w3_ref[...], preferred_element_type=jnp.float32) + b3_ref[...]

    # Numerically stable softmax over the lane (action) axis.
    m = jnp.max(logits, axis=-1, keepdims=True)
    e = jnp.exp(logits - m)
    denom = jnp.sum(e, axis=-1, keepdims=True)
    o_ref[...] = e * pl.reciprocal(denom, approx=True)


def policy_forward(x, padded_params, n_actions, batch_tile=256):
    """Wrapper: pads the batch to a sublane multiple, tiles it over a parallel grid,
    keeps the (tiny, pre-padded) weights whole in VMEM, and slices the result back."""
    w1, b1, w2, b2, w3, b3 = padded_params
    B, D = x.shape
    in_pad = w1.shape[0]
    out_pad = w3.shape[1]

    B8 = _round_up(B, SUBLANE)
    tb = min(B8, batch_tile)
    B_pad = _round_up(B8, tb)

    x_pad = jnp.pad(x.astype(jnp.float32), ((0, B_pad - B), (0, in_pad - D)))

    def full_spec(shape):
        return pl.BlockSpec(shape, lambda i: (0,) * len(shape))

    out = pl.pallas_call(
        policy_mlp_kernel,
        out_shape=jax.ShapeDtypeStruct((B_pad, out_pad), jnp.float32),
        grid=(B_pad // tb,),
        in_specs=[
            pl.BlockSpec((tb, in_pad), lambda i: (i, 0)),
            full_spec(w1.shape), full_spec(b1.shape),
            full_spec(w2.shape), full_spec(b2.shape),
            full_spec(w3.shape), full_spec(b3.shape),
        ],
        out_specs=pl.BlockSpec((tb, out_pad), lambda i: (i, 0)),
        compiler_params=pltpu.CompilerParams(
            dimension_semantics=("parallel",)),
    )(x_pad, w1, b1, w2, b2, w3, b3)

    return out[:B, :n_actions]


def init_params(key, architecture):
    """Deterministic init mimicking PyTorch nn.Linear default (uniform +/- 1/sqrt(fan_in)).
    Weights stored as [in_dim, out_dim] (transpose of PyTorch's [out, in])."""
    params = []
    for in_dim, out_dim in zip(architecture[:-1], architecture[1:]):
        key, kw, kb = jax.random.split(key, 3)
        bound = 1.0 / jnp.sqrt(jnp.float32(in_dim))
        w = jax.random.uniform(kw, (in_dim, out_dim), jnp.float32, -bound, bound)
        b = jax.random.uniform(kb, (1, out_dim), jnp.float32, -bound, bound)
        params.extend([w, b])
    return tuple(params)


def pad_params(params):
    """One-time lane/sublane padding of the parameters for the kernel.
    Zero-pad everything except the final bias, whose padded lanes get -1e30 so the
    corresponding softmax outputs are exactly zero."""
    w1, b1, w2, b2, w3, b3 = params
    d_in = _round_up(w1.shape[0], SUBLANE)
    h1 = _round_up(w1.shape[1], LANE)
    h2 = _round_up(w2.shape[1], LANE)
    n_out = _round_up(w3.shape[1], LANE)

    w1p = jnp.zeros((d_in, h1), jnp.float32).at[: w1.shape[0], : w1.shape[1]].set(w1)
    b1p = jnp.zeros((1, h1), jnp.float32).at[:, : b1.shape[1]].set(b1)
    w2p = jnp.zeros((h1, h2), jnp.float32).at[: w2.shape[0], : w2.shape[1]].set(w2)
    b2p = jnp.zeros((1, h2), jnp.float32).at[:, : b2.shape[1]].set(b2)
    w3p = jnp.zeros((h2, n_out), jnp.float32).at[: w3.shape[0], : w3.shape[1]].set(w3)
    b3p = jnp.full((1, n_out), NEG_MASK, jnp.float32).at[:, : b3.shape[1]].set(b3)
    return (w1p, b1p, w2p, b2p, w3p, b3p)


def reference_forward(x, params):
    """Pure-JAX reference of the same forward pass (for correctness checks)."""
    w1, b1, w2, b2, w3, b3 = params
    h = jnp.maximum(x @ w1 + b1, 0.0)
    h = jnp.maximum(h @ w2 + b2, 0.0)
    logits = h @ w3 + b3
    return jax.nn.softmax(logits, axis=1)


if __name__ == "__main__":
    # LunarLander-v2: observation dim 8, action dim 4; hiddenLayers = [32, 32].
    OBS_DIM, N_ACTIONS = 8, 4
    HIDDEN = [32, 32]
    BATCH = 2

    architecture = [OBS_DIM] + HIDDEN + [N_ACTIONS]

    key = jax.random.PRNGKey(0)
    key, kx = jax.random.split(key)
    x = jax.random.normal(kx, (BATCH, OBS_DIM), jnp.float32)
    params = init_params(key, architecture)
    padded_params = pad_params(params)

    # Small-batch run (B=2 -> padded to 8 rows, single grid step).
    probs = policy_forward(x, padded_params, N_ACTIONS)
    probs = jax.block_until_ready(probs)

    ref = reference_forward(x, params)
    assert probs.shape == (BATCH, N_ACTIONS)
    # approx reciprocal -> rows sum to 1 only to ~1e-3
    assert jnp.allclose(jnp.sum(probs, axis=1), 1.0, atol=3e-3)
    assert jnp.allclose(probs, ref, atol=3e-3, rtol=3e-3)

    # Larger rollout-style batch: exercises batch padding + multi-step parallel grid.
    key, kb = jax.random.split(key)
    xb = jax.random.normal(kb, (300, OBS_DIM), jnp.float32)
    probs_b = jax.block_until_ready(policy_forward(xb, padded_params, N_ACTIONS))
    ref_b = reference_forward(xb, params)
    assert probs_b.shape == (300, N_ACTIONS)
    assert jnp.allclose(probs_b, ref_b, atol=3e-3, rtol=3e-3)

    print("KERNEL_OK")
</pallas_src>

<mosaic_0001>
module attributes {stable_mosaic.version = 11 : i64} {
  func.func @policy_mlp_kernel(%arg0: i32, %arg1: memref<8x8xf32, #tpu.memory_space<vmem>>, %arg2: memref<8x128xf32, #tpu.memory_space<vmem>>, %arg3: memref<1x128xf32, #tpu.memory_space<vmem>>, %arg4: memref<128x128xf32, #tpu.memory_space<vmem>>, %arg5: memref<1x128xf32, #tpu.memory_space<vmem>>, %arg6: memref<128x128xf32, #tpu.memory_space<vmem>>, %arg7: memref<1x128xf32, #tpu.memory_space<vmem>>, %arg8: memref<8x128xf32, #tpu.memory_space<vmem>>) attributes {dimension_semantics = [#tpu.dimension_semantics<parallel>], iteration_bounds = array<i64: 1>, scalar_prefetch = 0 : i64, scratch_operands = 0 : i64, tpu.core_type = #tpu.core_type<tc>, window_params = [{transform_indices = @transform_0, window_bounds = array<i64: 8, 8>}, {pipeline_mode = #tpu.pipeline_mode<synchronous>, transform_indices = @transform_1, window_bounds = array<i64: 8, 128>}, {pipeline_mode = #tpu.pipeline_mode<synchronous>, transform_indices = @transform_2, window_bounds = array<i64: 1, 128>}, {pipeline_mode = #tpu.pipeline_mode<synchronous>, transform_indices = @transform_3, window_bounds = array<i64: 128, 128>}, {pipeline_mode = #tpu.pipeline_mode<synchronous>, transform_indices = @transform_4, window_bounds = array<i64: 1, 128>}, {pipeline_mode = #tpu.pipeline_mode<synchronous>, transform_indices = @transform_5, window_bounds = array<i64: 128, 128>}, {pipeline_mode = #tpu.pipeline_mode<synchronous>, transform_indices = @transform_6, window_bounds = array<i64: 1, 128>}, {transform_indices = @transform_7, window_bounds = array<i64: 8, 128>}]} {
    %c0 = arith.constant 0 : index
    %c0_0 = arith.constant 0 : index
    %0 = vector.load %arg1[%c0, %c0_0] : memref<8x8xf32, #tpu.memory_space<vmem>>, vector<8x8xf32>
    %c0_1 = arith.constant 0 : index
    %c0_2 = arith.constant 0 : index
    %1 = vector.load %arg2[%c0_1, %c0_2] : memref<8x128xf32, #tpu.memory_space<vmem>>, vector<8x128xf32>
    %cst = arith.constant dense<0.000000e+00> : vector<8x128xf32>
    %2 = tpu.matmul %0, %1, %cst {dimension_numbers = #tpu.dot_dimension_numbers<[1], [0], [0], [1], [0, 0, 1, 1], [], []>} : vector<8x8xf32>, vector<8x128xf32>, vector<8x128xf32> -> vector<8x128xf32>
    %c0_3 = arith.constant 0 : index
    %c0_4 = arith.constant 0 : index
    %3 = vector.load %arg3[%c0_3, %c0_4] : memref<1x128xf32, #tpu.memory_space<vmem>>, vector<1x128xf32>
    %4 = vector.broadcast %3 : vector<1x128xf32> to vector<8x128xf32>
    %5 = arith.addf %2, %4 : vector<8x128xf32>
    %cst_5 = arith.constant 0.000000e+00 : f32
    %6 = vector.broadcast %cst_5 : f32 to vector<8x128xf32>
    %7 = arith.maximumf %5, %6 : vector<8x128xf32>
    %c0_6 = arith.constant 0 : index
    %c0_7 = arith.constant 0 : index
    %8 = vector.load %arg4[%c0_6, %c0_7] : memref<128x128xf32, #tpu.memory_space<vmem>>, vector<128x128xf32>
    %cst_8 = arith.constant dense<0.000000e+00> : vector<8x128xf32>
    %9 = tpu.matmul %7, %8, %cst_8 {dimension_numbers = #tpu.dot_dimension_numbers<[1], [0], [0], [1], [0, 0, 1, 1], [], []>} : vector<8x128xf32>, vector<128x128xf32>, vector<8x128xf32> -> vector<8x128xf32>
    %c0_9 = arith.constant 0 : index
    %c0_10 = arith.constant 0 : index
    %10 = vector.load %arg5[%c0_9, %c0_10] : memref<1x128xf32, #tpu.memory_space<vmem>>, vector<1x128xf32>
    %11 = vector.broadcast %10 : vector<1x128xf32> to vector<8x128xf32>
    %12 = arith.addf %9, %11 : vector<8x128xf32>
    %cst_11 = arith.constant 0.000000e+00 : f32
    %13 = vector.broadcast %cst_11 : f32 to vector<8x128xf32>
    %14 = arith.maximumf %12, %13 : vector<8x128xf32>
    %c0_12 = arith.constant 0 : index
    %c0_13 = arith.constant 0 : index
    %15 = vector.load %arg6[%c0_12, %c0_13] : memref<128x128xf32, #tpu.memory_space<vmem>>, vector<128x128xf32>
    %cst_14 = arith.constant dense<0.000000e+00> : vector<8x128xf32>
    %16 = tpu.matmul %14, %15, %cst_14 {dimension_numbers = #tpu.dot_dimension_numbers<[1], [0], [0], [1], [0, 0, 1, 1], [], []>} : vector<8x128xf32>, vector<128x128xf32>, vector<8x128xf32> -> vector<8x128xf32>
    %c0_15 = arith.constant 0 : index
    %c0_16 = arith.constant 0 : index
    %17 = vector.load %arg7[%c0_15, %c0_16] : memref<1x128xf32, #tpu.memory_space<vmem>>, vector<1x128xf32>
    %18 = vector.broadcast %17 : vector<1x128xf32> to vector<8x128xf32>
    %19 = arith.addf %16, %18 : vector<8x128xf32>
    %cst_17 = arith.constant dense<0xFF800000> : vector<8xf32>
    %20 = vector.multi_reduction <maximumf>, %19, %cst_17 [1] : vector<8x128xf32> to vector<8xf32>
    %21 = vector.shape_cast %20 : vector<8xf32> to vector<8x1xf32>
    %22 = vector.broadcast %21 : vector<8x1xf32> to vector<8x128xf32>
    %23 = arith.subf %19, %22 : vector<8x128xf32>
    %24 = math.exp %23 : vector<8x128xf32>
    %cst_18 = arith.constant dense<0.000000e+00> : vector<8xf32>
    %25 = vector.multi_reduction <add>, %24, %cst_18 [1] : vector<8x128xf32> to vector<8xf32>
    %26 = vector.shape_cast %25 : vector<8xf32> to vector<8x1xf32>
    %27 = tpu.reciprocal %26 {approx = true} : vector<8x1xf32> -> vector<8x1xf32>
    %28 = vector.broadcast %27 : vector<8x1xf32> to vector<8x128xf32>
    %29 = arith.mulf %24, %28 : vector<8x128xf32>
    %c0_19 = arith.constant 0 : index
    %c0_20 = arith.constant 0 : index
    %30 = vector.load %arg8[%c0_19, %c0_20] : memref<8x128xf32, #tpu.memory_space<vmem>>, vector<8x128xf32>
    tpu.vector_store %arg8[%c0_19, %c0_20], %29 {strides = array<i32>} : memref<8x128xf32, #tpu.memory_space<vmem>>, vector<8x128xf32>,
    return
  }
  func.func @transform_0(%arg0: i32) -> (i32, i32) {
    %c0_i32 = arith.constant 0 : i32
    %c0_i32_0 = arith.constant 0 : i32
    return %arg0, %c0_i32 : i32, i32
  }
  func.func @transform_1(%arg0: i32) -> (i32, i32) {
    %c0_i32 = arith.constant 0 : i32
    %c0_i32_0 = arith.constant 0 : i32
    %c0_i32_1 = arith.constant 0 : i32
    return %c0_i32, %c0_i32_0 : i32, i32
  }
  func.func @transform_2(%arg0: i32) -> (i32, i32) {
    %c0_i32 = arith.constant 0 : i32
    %c0_i32_0 = arith.constant 0 : i32
    %c0_i32_1 = arith.constant 0 : i32
    return %c0_i32, %c0_i32_0 : i32, i32
  }
  func.func @transform_3(%arg0: i32) -> (i32, i32) {
    %c0_i32 = arith.constant 0 : i32
    %c0_i32_0 = arith.constant 0 : i32
    %c0_i32_1 = arith.constant 0 : i32
    return %c0_i32, %c0_i32_0 : i32, i32
  }
  func.func @transform_4(%arg0: i32) -> (i32, i32) {
    %c0_i32 = arith.constant 0 : i32
    %c0_i32_0 = arith.constant 0 : i32
    %c0_i32_1 = arith.constant 0 : i32
    return %c0_i32, %c0_i32_0 : i32, i32
  }
  func.func @transform_5(%arg0: i32) -> (i32, i32) {
    %c0_i32 = arith.constant 0 : i32
    %c0_i32_0 = arith.constant 0 : i32
    %c0_i32_1 = arith.constant 0 : i32
    return %c0_i32, %c0_i32_0 : i32, i32
  }
  func.func @transform_6(%arg0: i32) -> (i32, i32) {
    %c0_i32 = arith.constant 0 : i32
    %c0_i32_0 = arith.constant 0 : i32
    %c0_i32_1 = arith.constant 0 : i32
    return %c0_i32, %c0_i32_0 : i32, i32
  }
  func.func @transform_7(%arg0: i32) -> (i32, i32) {
    %c0_i32 = arith.constant 0 : i32
    %c0_i32_0 = arith.constant 0 : i32
    return %arg0, %c0_i32 : i32, i32
  }
}

</mosaic_0001>

<llo_original>
// kernel: tpu_custom_call.1
$region0: #{tpu_custom_call.1}
  #allocation0 [shape = 'u32[]', space=smem, size = 0x4, offset = 0x4, fixed_abs, tag = 'smem constant byte address 0x4 - core index']
  #allocation1 [shape = 'u32[72,128]{1,0:T(1,128)}', space=vmem, size = 0x9000, scoped, tag = 'internal scratch']
  %s0 = inlined_call_operand.hbm [shape: f32[8,8], index: 0, kind: input, shape index: {}]
  %s1 = inlined_call_operand.hbm [shape: f32[8,128], index: 1, kind: input, shape index: {}]
  %s2 = inlined_call_operand.vmem [shape: f32[1,128], index: 2, kind: input, shape index: {}]
  %s3 = inlined_call_operand.hbm [shape: f32[128,128], index: 3, kind: input, shape index: {}]
  %s4 = inlined_call_operand.vmem [shape: f32[1,128], index: 4, kind: input, shape index: {}]
  %s5 = inlined_call_operand.hbm [shape: f32[128,128], index: 5, kind: input, shape index: {}]
  %s6 = inlined_call_operand.vmem [shape: f32[1,128], index: 6, kind: input, shape index: {}]
  %s7 = inlined_call_operand.hbm [shape: f32[8,128], index: 7, kind: output, shape index: {}]
  %s8 = sld [smem:[#allocation0]]
  $region54: #{tpu_custom_call.1} parent=0
    _
  %s10 = ssub.s32 1, %s8
  %s11 = scalar_select 0, %s10, %s8
  $region1: #{tpu_custom_call.1} parent=0
    #allocation2 [shape = 'u8[4096]{0}', space=vmem, size = 0x1000, scoped, tag = 'input window, operand 0, single buffered']
    #allocation3 [shape = 's32[1]{0}', space=sflag, size = 0x4, scoped, tag = 'scoped memory for tpu_custom_call.1']
    #allocation4 [shape = 's32[1]{0}', space=sflag, size = 0x4, scoped, tag = 'scoped memory for tpu_custom_call.1']
    #allocation5 [shape = 'u8[4096]{0}', space=vmem, size = 0x1000, scoped, tag = 'input window, operand 1, single buffered']
    #allocation6 [shape = 's32[1]{0}', space=sflag, size = 0x4, scoped, tag = 'scoped memory for tpu_custom_call.1']
    #allocation7 [shape = 'u8[65536]{0}', space=vmem, size = 0x10000, scoped, tag = 'input window, operand 3, single buffered']
    #allocation8 [shape = 'u8[65536]{0}', space=vmem, size = 0x10000, scoped, tag = 'input window, operand 5, single buffered']
    #allocation9 [shape = 's32[1]{0}', space=sflag, size = 0x4, scoped, tag = 'scoped memory for tpu_custom_call.1']
    #allocation10 [shape = 'u8[4096]{0}', space=vmem, size = 0x1000, scoped, tag = 'output window, operand 0, single buffered']
    %12 = vsyncpa [#allocation3], 0
    %13 = vsyncpa [#allocation6], 0
    %14 = vsyncpa [#allocation9], 0
    %15 = vsyncpa [#allocation4], 0
    // Predicated region
    $region2: #{tpu_custom_call.1} parent=1 // pred_check
      _
    $region3: #{tpu_custom_call.1} parent=1 // pred_check_branch
      %17 = sbr.rel (0) target = $region5
    $region4: #{tpu_custom_call.1} parent=1 // pred_region
      %19 = vsyncadd [#allocation3], 0
      %s21 = sshll.u32 %s0, 4
      %s22 = int_to_ptr.hbm [resolvable:$true] %s21
      %s23 = sshll.u32 [#allocation2], 4
      %s24 = int_to_ptr.vmem [resolvable:$true] %s23
      %26 = dma.hbm_to_vmem [thread:$0]  %s22, 128, %s24, [#allocation3]
    $region5: #{tpu_custom_call.1} parent=1 // pred_fallthru
      _
    // Predicated region
    $region6: #{tpu_custom_call.1} parent=1 // pred_check
      _
    $region7: #{tpu_custom_call.1} parent=1 // pred_check_branch
      %28 = sbr.rel (0) target = $region9
    $region8: #{tpu_custom_call.1} parent=1 // pred_region
      %30 = vsyncadd [#allocation6], 0
      %s32 = sshll.u32 %s1, 4
      %s33 = int_to_ptr.hbm [resolvable:$true] %s32
      %s34 = sshll.u32 [#allocation5], 4
      %s35 = int_to_ptr.vmem [resolvable:$true] %s34
      %37 = dma.hbm_to_vmem [thread:$0]  %s33, 128, %s35, [#allocation6]
    $region9: #{tpu_custom_call.1} parent=1 // pred_fallthru
      _
    // Predicated region
    $region10: #{tpu_custom_call.1} parent=1 // pred_check
      _
    $region11: #{tpu_custom_call.1} parent=1 // pred_check_branch
      %39 = sbr.rel (0) target = $region13
    $region12: #{tpu_custom_call.1} parent=1 // pred_region
      _
    $region13: #{tpu_custom_call.1} parent=1 // pred_fallthru
      _
    // Predicated region
    $region14: #{tpu_custom_call.1} parent=1 // pred_check
      _
    $region15: #{tpu_custom_call.1} parent=1 // pred_check_branch
      %41 = sbr.rel (0) target = $region17
    $region16: #{tpu_custom_call.1} parent=1 // pred_region
      %43 = vsyncadd [#allocation6], 0
      %s44 = sshll.u32 %s3, 4
      %s45 = int_to_ptr.hbm [resolvable:$true] %s44
      %s46 = sshll.u32 [#allocation7], 4
      %s47 = int_to_ptr.vmem [resolvable:$true] %s46
      %52 = dma.hbm_to_vmem [thread:$0]  %s45, 2048, %s47, [#allocation6], 128, 128, 8
    $region17: #{tpu_custom_call.1} parent=1 // pred_fallthru
      _
    // Predicated region
    $region18: #{tpu_custom_call.1} parent=1 // pred_check
      _
    $region19: #{tpu_custom_call.1} parent=1 // pred_check_branch
      %54 = sbr.rel (0) target = $region21
    $region20: #{tpu_custom_call.1} parent=1 // pred_region
      _
    $region21: #{tpu_custom_call.1} parent=1 // pred_fallthru
      _
    // Predicated region
    $region22: #{tpu_custom_call.1} parent=1 // pred_check
      _
    $region23: #{tpu_custom_call.1} parent=1 // pred_check_branch
      %56 = sbr.rel (0) target = $region25
    $region24: #{tpu_custom_call.1} parent=1 // pred_region
      %58 = vsyncadd [#allocation9], 0
      %s59 = sshll.u32 %s5, 4
      %s60 = int_to_ptr.hbm [resolvable:$true] %s59
      %s61 = sshll.u32 [#allocation8], 4
      %s62 = int_to_ptr.vmem [resolvable:$true] %s61
      %67 = dma.hbm_to_vmem [thread:$0]  %s60, 2048, %s62, [#allocation9], 128, 128, 8
    $region25: #{tpu_custom_call.1} parent=1 // pred_fallthru
      _
    // Predicated region
    $region26: #{tpu_custom_call.1} parent=1 // pred_check
      _
    $region27: #{tpu_custom_call.1} parent=1 // pred_check_branch
      %69 = sbr.rel (0) target = $region29
    $region28: #{tpu_custom_call.1} parent=1 // pred_region
      _
    $region29: #{tpu_custom_call.1} parent=1 // pred_fallthru
      _
    // Predicated region
    $region30: #{tpu_custom_call.1} parent=1 // pred_check
      _
    $region31: #{tpu_custom_call.1} parent=1 // pred_check_branch
      %71 = sbr.rel (0) target = $region33
    $region32: #{tpu_custom_call.1} parent=1 // pred_region
      %73 = dma.done [#allocation3], 128
    $region33: #{tpu_custom_call.1} parent=1 // pred_fallthru
      _
    // Predicated region
    $region34: #{tpu_custom_call.1} parent=1 // pred_check
      _
    $region35: #{tpu_custom_call.1} parent=1 // pred_check_branch
      %75 = sbr.rel (0) target = $region37
    $region36: #{tpu_custom_call.1} parent=1 // pred_region
      %77 = dma.done [#allocation6], 128
    $region37: #{tpu_custom_call.1} parent=1 // pred_fallthru
      _
    // Predicated region
    $region38: #{tpu_custom_call.1} parent=1 // pred_check
      _
    $region39: #{tpu_custom_call.1} parent=1 // pred_check_branch
      %79 = sbr.rel (0) target = $region41
    $region40: #{tpu_custom_call.1} parent=1 // pred_region
      %81 = dma.done [#allocation6], 2048
    $region41: #{tpu_custom_call.1} parent=1 // pred_fallthru
      _
    // Predicated region
    $region42: #{tpu_custom_call.1} parent=1 // pred_check
      _
    $region43: #{tpu_custom_call.1} parent=1 // pred_check_branch
      %83 = sbr.rel (0) target = $region45
    $region44: #{tpu_custom_call.1} parent=1 // pred_region
      %85 = dma.done [#allocation9], 2048
    $region45: #{tpu_custom_call.1} parent=1 // pred_fallthru
      _
    %v86 = vld [vmem:[#allocation2] sm:$0xff]
    %v87 = vld [vmem:[#allocation5] sm:$0xff]
    %v88 = vld [vmem:[%s2] sm:$0x1]
    %v90 = vperm.slane %v88, 0
    %vm92 = vcmask 64512
    %v94 = vsel %vm92, %v86, 0
    %96 = vmatpush.msra.mxu0 0.0
    %97 = vmatpush.msra.mxu0 0.0
    %98 = vmatpush.msra.mxu0 0.0
    %99 = vmatpush.msra.mxu0 0.0
    %100 = vmatpush.msra.mxu0 0.0
    %101 = vmatpush.msra.mxu0 0.0
    %102 = vmatpush.msra.mxu0 0.0
    %103 = vmatpush.msra.mxu0 0.0
    %104 = vmatpush.msra.mxu0 0.0
    %105 = vmatpush.msra.mxu0 0.0
    %106 = vmatpush.msra.mxu0 0.0
    %107 = vmatpush.msra.mxu0 0.0
    %108 = vmatpush.msra.mxu0 0.0
    %109 = vmatpush.msra.mxu0 0.0
    %110 = vmatpush.msra.mxu0 0.0
    %111 = vmatpush.msra.mxu0 %v87
    %112 = vmatmul.f32.gmra.mxu0 %v94
    %v113 = vpop.f32.mrf.mxu0
    %v114 = vadd.f32 %v90, %v113
    %115 = vdwg.mxu0
    %v116 = vmax.f32 %v114, 0.0
    %v117 = vld [vmem:[#allocation7] sm:$0xff]
    %v118 = vld [vmem:[#allocation7 + $0x8] sm:$0xff]
    %v119 = vld [vmem:[#allocation7 + $0x10] sm:$0xff]
    %v120 = vld [vmem:[#allocation7 + $0x18] sm:$0xff]
    %v121 = vld [vmem:[#allocation7 + $0x20] sm:$0xff]
    %v122 = vld [vmem:[#allocation7 + $0x28] sm:$0xff]
    %v123 = vld [vmem:[#allocation7 + $0x30] sm:$0xff]
    %v124 = vld [vmem:[#allocation7 + $0x38] sm:$0xff]
    %v125 = vld [vmem:[#allocation7 + $0x40] sm:$0xff]
    %v126 = vld [vmem:[#allocation7 + $0x48] sm:$0xff]
    %v127 = vld [vmem:[#allocation7 + $0x50] sm:$0xff]
    %v128 = vld [vmem:[#allocation7 + $0x58] sm:$0xff]
    %v129 = vld [vmem:[#allocation7 + $0x60] sm:$0xff]
    %v130 = vld [vmem:[#allocation7 + $0x68] sm:$0xff]
    %v131 = vld [vmem:[#allocation7 + $0x70] sm:$0xff]
    %v132 = vld [vmem:[#allocation7 + $0x78] sm:$0xff]
    %v133 = vld [vmem:[%s4] sm:$0x1]
    %v135 = vperm.slane %v133, 0
    %137 = vmatpush.msra.mxu0 %v132
    %138 = vmatpush.msra.mxu0 %v131
    %139 = vmatpush.msra.mxu0 %v130
    %140 = vmatpush.msra.mxu0 %v129
    %141 = vmatpush.msra.mxu0 %v128
    %142 = vmatpush.msra.mxu0 %v127
    %143 = vmatpush.msra.mxu0 %v126
    %144 = vmatpush.msra.mxu0 %v125
    %145 = vmatpush.msra.mxu0 %v124
    %146 = vmatpush.msra.mxu0 %v123
    %147 = vmatpush.msra.mxu0 %v122
    %148 = vmatpush.msra.mxu0 %v121
    %149 = vmatpush.msra.mxu0 %v120
    %150 = vmatpush.msra.mxu0 %v119
    %151 = vmatpush.msra.mxu0 %v118
    %152 = vmatpush.msra.mxu0 %v117
    %153 = vmatmul.f32.gmra.mxu0 %v116
    %v154 = vpop.f32.mrf.mxu0
    %v155 = vadd.f32 %v135, %v154
    %156 = vdwg.mxu0
    %v157 = vmax.f32 %v155, 0.0
    %v158 = vld [vmem:[#allocation8] sm:$0xff]
    %v159 = vld [vmem:[#allocation8 + $0x8] sm:$0xff]
    %v160 = vld [vmem:[#allocation8 + $0x10] sm:$0xff]
    %v161 = vld [vmem:[#allocation8 + $0x18] sm:$0xff]
    %v162 = vld [vmem:[#allocation8 + $0x20] sm:$0xff]
    %v163 = vld [vmem:[#allocation8 + $0x28] sm:$0xff]
    %v164 = vld [vmem:[#allocation8 + $0x30] sm:$0xff]
    %v165 = vld [vmem:[#allocation8 + $0x38] sm:$0xff]
    %v166 = vld [vmem:[#allocation8 + $0x40] sm:$0xff]
    %v167 = vld [vmem:[#allocation8 + $0x48] sm:$0xff]
    %v168 = vld [vmem:[#allocation8 + $0x50] sm:$0xff]
    %v169 = vld [vmem:[#allocation8 + $0x58] sm:$0xff]
    %v170 = vld [vmem:[#allocation8 + $0x60] sm:$0xff]
    %v171 = vld [vmem:[#allocation8 + $0x68] sm:$0xff]
    %v172 = vld [vmem:[#allocation8 + $0x70] sm:$0xff]
    %v173 = vld [vmem:[#allocation8 + $0x78] sm:$0xff]
    %v174 = vld [vmem:[%s6] sm:$0x1]
    %v176 = vperm.slane %v174, 0
    %178 = vmatpush.msra.mxu0 %v173
    %179 = vmatpush.msra.mxu0 %v172
    %180 = vmatpush.msra.mxu0 %v171
    %181 = vmatpush.msra.mxu0 %v170
    %182 = vmatpush.msra.mxu0 %v169
    %183 = vmatpush.msra.mxu0 %v168
    %184 = vmatpush.msra.mxu0 %v167
    %185 = vmatpush.msra.mxu0 %v166
    %186 = vmatpush.msra.mxu0 %v165
    %187 = vmatpush.msra.mxu0 %v164
    %188 = vmatpush.msra.mxu0 %v163
    %189 = vmatpush.msra.mxu0 %v162
    %190 = vmatpush.msra.mxu0 %v161
    %191 = vmatpush.msra.mxu0 %v160
    %192 = vmatpush.msra.mxu0 %v159
    %193 = vmatpush.msra.mxu0 %v158
    %194 = vmatmul.f32.gmra.mxu0 %v157
    %v195 = vpop.f32.mrf.mxu0
    %v196 = vadd.f32 %v176, %v195
    %197 = vdwg.mxu0
    %198 = vmax.xlane.f32.xlu0 %v196
    %v199 = vpop.xlane.xlu0 %198
    %v200 = vsub.f32 %v196, %v199
    %v201 = vmul.f32 %v200, 1.442695
    %v202 = vpow.pop %v201
    %203 = vadd.xlane.f32.xlu0 %v202
    %v204 = vpop.xlane.xlu0 %203
    %v205 = vrcp.pop %v204
    %v206 = vmul.f32 %v202, %v205
    %207 = vst [vmem:[#allocation10] sm:$0xff] %v206
    // Predicated region
    $region46: #{tpu_custom_call.1} parent=1 // pred_check
      _
    $region47: #{tpu_custom_call.1} parent=1 // pred_check_branch
      %209 = sbr.rel (0) target = $region49
    $region48: #{tpu_custom_call.1} parent=1 // pred_region
      %211 = vsyncadd [#allocation4], 0
      %s213 = sshll.u32 [#allocation10], 4
      %s214 = int_to_ptr.vmem [resolvable:$true] %s213
      %s215 = sshll.u32 %s7, 4
      %s216 = int_to_ptr.hbm [resolvable:$true] %s215
      %218 = dma.vmem_to_hbm [thread:$0]  %s214, 128, %s216, [#allocation4]
    $region49: #{tpu_custom_call.1} parent=1 // pred_fallthru
      _
    // Predicated region
    $region50: #{tpu_custom_call.1} parent=1 // pred_check
      _
    $region51: #{tpu_custom_call.1} parent=1 // pred_check_branch
      %220 = sbr.rel (0) target = $region53
    $region52: #{tpu_custom_call.1} parent=1 // pred_region
      %222 = dma.done [#allocation4], 128
    $region53: #{tpu_custom_call.1} parent=1 // pred_fallthru
      _
    %223 = vsyncpa [#allocation3], 1
    %224 = vsyncpa [#allocation6], 1
    %225 = vsyncpa [#allocation9], 1
    %226 = vsyncpa [#allocation4], 1

</llo_original>
